<compile_context>
chip_gen: v7x
topology: tpu7x:2x2x1
jax: 0.10.0
libtpu: 0.0.40
codegen_flags: <defaults>
</compile_context>

<pallas_src>
import functools
import math

import numpy as np
import jax
import jax.numpy as jnp
from jax import lax
from jax.experimental import pallas as pl
from jax.experimental.pallas import tpu as pltpu

GRID_MIN, GRID_MAX, NUM_GRIDS = -2.0, 2.0, 8
BN_EPS = 1e-5


def _kanconv_kernel(x_ref, w_ref, b_ref, y_ref, s1_ref, s2_ref,
                    *, H, W, Cin, Cout, G, Kpad):
    """One image per grid step: SiLU + vectorized RBF + one fused 3x3-conv matmul."""
    HW = H * W
    Ctot = Cin * (1 + G)
    x = x_ref[0]                                    # (Cin, HW), f32, HW on lanes

    # --- expanded features ---------------------------------------------------
    base = x * jax.nn.sigmoid(x)                    # SiLU, (Cin, HW)

    denom = (GRID_MAX - GRID_MIN) / (G - 1)
    gidx = lax.broadcasted_iota(jnp.int32, (1, G, 1), 1).astype(jnp.float32)
    grid_vals = GRID_MIN + denom * gidx             # (1, G, 1)
    d = (x[:, None, :] - grid_vals) / denom         # (Cin, G, HW)
    rbf = jnp.exp(-d * d).reshape(Cin * G, HW)      # channel-major / grid-minor

    parts = [base, rbf]
    if Kpad > Ctot:                                 # pad K to a sublane multiple
        parts.append(jnp.zeros((Kpad - Ctot, HW), jnp.float32))
    feat = jnp.concatenate(parts, axis=0)           # (Kpad, HW)

    # --- 9-tap im2col stack along lanes: roll + static boundary masks --------
    lane = lax.broadcasted_iota(jnp.int32, (1, HW), 1)
    if (W & (W - 1)) == 0:
        col = lane & (W - 1)                        # x position within a row
    else:
        col = lane % W                              # generic fallback

    taps = []
    for dy in range(3):
        for dx in range(3):
            ry, rx = dy - 1, dx - 1
            off = ry * W + rx
            shifted = feat if off == 0 else pltpu.roll(feat, (-off) % HW, 1)
            valid = None
            if ry < 0:
                valid = lane >= (-ry) * W
            elif ry > 0:
                valid = lane < (H - ry) * W
            if rx < 0:
                m = col >= -rx
                valid = m if valid is None else (valid & m)
            elif rx > 0:
                m = col < (W - rx)
                valid = m if valid is None else (valid & m)
            taps.append(shifted if valid is None
                        else jnp.where(valid, shifted, 0.0))
    x_all = jnp.concatenate(taps, axis=0)           # (9*Kpad, HW)

    # --- fused conv: single MXU matmul, lane-dense output --------------------
    acc = jnp.dot(w_ref[...], x_all, preferred_element_type=jnp.float32)
    acc = acc + b_ref[...]                          # (Cout, HW) + (Cout, 1)
    y_ref[0] = acc

    # --- per-image BatchNorm sufficient statistics ----------------------------
    s1_ref[0] = jnp.sum(acc, axis=1, keepdims=True)         # (Cout, 1)
    s2_ref[0] = jnp.sum(acc * acc, axis=1, keepdims=True)   # (Cout, 1)


def _bn_apply_kernel(y_ref, scale_ref, shift_ref, o_ref):
    o_ref[0] = y_ref[0] * scale_ref[...] + shift_ref[...]


def kan_conv_block(x_nchw, w_hwio, bias, gamma, beta):
    N, Cin, H, W = x_nchw.shape
    kh, kw, Ctot, Cout = w_hwio.shape
    G = NUM_GRIDS
    assert (kh, kw) == (3, 3) and Ctot == Cin * (1 + G)
    HW = H * W
    Kpad = ((Ctot + 7) // 8) * 8                    # per-tap K, sublane aligned

    # NCHW -> (N, Cin, H*W): channels on sublanes, flat spatial on lanes.
    x_flat = x_nchw.reshape(N, Cin, HW).astype(jnp.float32)

    # Pack weights once: (3,3,Ctot,Cout) -> (Cout, 9*Kpad), tap-major,
    # zero rows at the padded K positions; lane-dense and resident across steps.
    w_p = jnp.pad(w_hwio.astype(jnp.float32),
                  ((0, 0), (0, 0), (0, Kpad - Ctot), (0, 0)))
    w_packed = jnp.transpose(w_p, (3, 0, 1, 2)).reshape(Cout, 9 * Kpad)
    b_col = bias.reshape(Cout, 1).astype(jnp.float32)

    conv = pl.pallas_call(
        functools.partial(_kanconv_kernel, H=H, W=W, Cin=Cin, Cout=Cout,
                          G=G, Kpad=Kpad),
        out_shape=(
            jax.ShapeDtypeStruct((N, Cout, HW), jnp.float32),
            jax.ShapeDtypeStruct((N, Cout, 1), jnp.float32),
            jax.ShapeDtypeStruct((N, Cout, 1), jnp.float32),
        ),
        grid=(N,),
        in_specs=[
            pl.BlockSpec((1, Cin, HW), lambda n: (n, 0, 0)),
            pl.BlockSpec((Cout, 9 * Kpad), lambda n: (0, 0)),
            pl.BlockSpec((Cout, 1), lambda n: (0, 0)),
        ],
        out_specs=(
            pl.BlockSpec((1, Cout, HW), lambda n: (n, 0, 0)),
            pl.BlockSpec((1, Cout, 1), lambda n: (n, 0, 0)),
            pl.BlockSpec((1, Cout, 1), lambda n: (n, 0, 0)),
        ),
        compiler_params=pltpu.CompilerParams(
            dimension_semantics=("parallel",)),
    )
    y, s1, s2 = conv(x_flat, w_packed, b_col)

    # Tiny (N, Cout) reduction + BN scale/shift folding in plain XLA.
    count = jnp.float32(N * HW)
    mean = jnp.sum(s1[:, :, 0], axis=0) / count                       # (Cout,)
    var = jnp.maximum(jnp.sum(s2[:, :, 0], axis=0) / count - mean * mean, 0.0)
    scale = gamma.reshape(-1).astype(jnp.float32) * lax.rsqrt(var + BN_EPS)
    shift = beta.reshape(-1).astype(jnp.float32) - mean * scale
    # TODO(synk): running_mean/running_var momentum updates (stateful BN
    # buffers) are a training side effect and are not materialized here.

    bn = pl.pallas_call(
        _bn_apply_kernel,
        out_shape=jax.ShapeDtypeStruct((N, Cout, HW), jnp.float32),
        grid=(N,),
        in_specs=[
            pl.BlockSpec((1, Cout, HW), lambda n: (n, 0, 0)),
            pl.BlockSpec((Cout, 1), lambda n: (0, 0)),
            pl.BlockSpec((Cout, 1), lambda n: (0, 0)),
        ],
        out_specs=pl.BlockSpec((1, Cout, HW), lambda n: (n, 0, 0)),
        compiler_params=pltpu.CompilerParams(
            dimension_semantics=("parallel",)),
    )
    out = bn(y, scale.reshape(Cout, 1), shift.reshape(Cout, 1))
    return out.reshape(N, Cout, H, W)               # already NCHW


def ref_forward(x_nchw, w_hwio, bias, gamma, beta):
    """Pure-JAX reference mirroring the PyTorch forward."""
    x = jnp.transpose(x_nchw, (0, 2, 3, 1)).astype(jnp.float32)      # NHWC
    N, H, W, Cin = x.shape
    G = NUM_GRIDS
    denom = (GRID_MAX - GRID_MIN) / (G - 1)
    grid = GRID_MIN + denom * jnp.arange(G, dtype=jnp.float32)
    rbf = jnp.exp(-(((x[..., None] - grid) / denom) ** 2))           # (N,H,W,Cin,G)
    feat = jnp.concatenate([jax.nn.silu(x), rbf.reshape(N, H, W, Cin * G)], axis=-1)
    y = lax.conv_general_dilated(
        feat, w_hwio, window_strides=(1, 1), padding="SAME",
        dimension_numbers=("NHWC", "HWIO", "NHWC"),
    ) + bias.reshape(1, 1, 1, -1)
    mean = y.mean(axis=(0, 1, 2), keepdims=True)
    var = ((y - mean) ** 2).mean(axis=(0, 1, 2), keepdims=True)
    out = (y - mean) * lax.rsqrt(var + BN_EPS) * gamma.reshape(1, 1, 1, -1) \
        + beta.reshape(1, 1, 1, -1)
    return jnp.transpose(out, (0, 3, 1, 2))


if __name__ == "__main__":
    N, Cin, Cout, H, W = 2, 4, 8, 16, 16
    G = NUM_GRIDS
    Ctot = Cin * (1 + G)

    key = jax.random.PRNGKey(0)
    kx, kwb, kws, kb = jax.random.split(key, 4)

    x = jax.random.normal(kx, (N, Cin, H, W), jnp.float32)

    # Deterministic parameter init (shapes per FastKANConvLayer + BatchNorm2d).
    w_base = jax.random.normal(kwb, (3, 3, Cin, Cout), jnp.float32) / math.sqrt(9 * Cin)
    w_spline = 0.1 * jax.random.normal(kws, (3, 3, Cin * G, Cout), jnp.float32) \
        / math.sqrt(9 * Cin * G)
    w = jnp.concatenate([w_base, w_spline], axis=2)       # (3,3,Ctot,Cout) HWIO
    bias = 0.02 * jax.random.normal(kb, (Cout,), jnp.float32)
    gamma = jnp.ones((Cout,), jnp.float32)                # BatchNorm2d weight
    beta = jnp.zeros((Cout,), jnp.float32)                # BatchNorm2d bias

    out = jax.block_until_ready(kan_conv_block(x, w, bias, gamma, beta))
    ref = jax.block_until_ready(ref_forward(x, w, bias, gamma, beta))
    np.testing.assert_allclose(np.asarray(out), np.asarray(ref), rtol=2e-4, atol=2e-4)
    print("KERNEL_OK")
</pallas_src>

<mosaic_0001>
module attributes {stable_mosaic.version = 11 : i64} {
  func.func @_kanconv_kernel(%arg0: i32, %arg1: memref<1x4x256xf32, #tpu.memory_space<vmem>>, %arg2: memref<8x360xf32, #tpu.memory_space<vmem>>, %arg3: memref<8x1xf32, #tpu.memory_space<vmem>>, %arg4: memref<1x8x256xf32, #tpu.memory_space<vmem>>, %arg5: memref<1x8x1xf32, #tpu.memory_space<vmem>>, %arg6: memref<1x8x1xf32, #tpu.memory_space<vmem>>) attributes {dimension_semantics = [#tpu.dimension_semantics<parallel>], iteration_bounds = array<i64: 2>, scalar_prefetch = 0 : i64, scratch_operands = 0 : i64, tpu.core_type = #tpu.core_type<tc>, window_params = [{transform_indices = @transform_0, window_bounds = array<i64: 1, 4, 256>}, {pipeline_mode = #tpu.pipeline_mode<synchronous>, transform_indices = @transform_1, window_bounds = array<i64: 8, 360>}, {pipeline_mode = #tpu.pipeline_mode<synchronous>, transform_indices = @transform_2, window_bounds = array<i64: 8, 1>}, {transform_indices = @transform_3, window_bounds = array<i64: 1, 8, 256>}, {transform_indices = @transform_4, window_bounds = array<i64: 1, 8, 1>}, {transform_indices = @transform_5, window_bounds = array<i64: 1, 8, 1>}]} {
    %c0 = arith.constant 0 : index
    %c0_0 = arith.constant 0 : index
    %c0_1 = arith.constant 0 : index
    %0 = vector.load %arg1[%c0, %c0_0, %c0_1] : memref<1x4x256xf32, #tpu.memory_space<vmem>>, vector<1x4x256xf32>
    %1 = vector.shape_cast %0 : vector<1x4x256xf32> to vector<4x256xf32>
    %2 = arith.negf %1 : vector<4x256xf32>
    %3 = math.exp %2 : vector<4x256xf32>
    %cst = arith.constant 1.000000e+00 : f32
    %4 = vector.broadcast %cst : f32 to vector<4x256xf32>
    %5 = arith.addf %4, %3 : vector<4x256xf32>
    %6 = arith.divf %4, %5 : vector<4x256xf32>
    %7 = arith.mulf %1, %6 : vector<4x256xf32>
    %8 = tpu.iota {dimensions = array<i32: 1>} : vector<1x8x1xi32>
    %9 = arith.sitofp %8 : vector<1x8x1xi32> to vector<1x8x1xf32>
    %cst_2 = arith.constant 0.571428597 : f32
    %10 = vector.broadcast %cst_2 : f32 to vector<1x8x1xf32>
    %11 = arith.mulf %10, %9 : vector<1x8x1xf32>
    %cst_3 = arith.constant -2.000000e+00 : f32
    %12 = vector.broadcast %cst_3 : f32 to vector<1x8x1xf32>
    %13 = arith.addf %12, %11 : vector<1x8x1xf32>
    %14 = vector.shape_cast %1 : vector<4x256xf32> to vector<4x1x256xf32>
    %15 = vector.broadcast %14 : vector<4x1x256xf32> to vector<4x8x256xf32>
    %16 = vector.broadcast %13 : vector<1x8x1xf32> to vector<4x8x256xf32>
    %17 = arith.subf %15, %16 : vector<4x8x256xf32>
    %cst_4 = arith.constant 0.571428597 : f32
    %18 = vector.broadcast %cst_4 : f32 to vector<4x8x256xf32>
    %19 = arith.divf %17, %18 : vector<4x8x256xf32>
    %cst_5 = arith.constant 0.000000e+00 : f32
    %20 = vector.broadcast %cst_5 : f32 to vector<4x8x256xf32>
    %21 = arith.subf %20, %19 : vector<4x8x256xf32>
    %22 = arith.mulf %21, %19 : vector<4x8x256xf32>
    %23 = math.exp %22 : vector<4x8x256xf32>
    %24 = vector.shape_cast %23 : vector<4x8x256xf32> to vector<32x256xf32>
    %cst_6 = arith.constant 0.000000e+00 : f32
    %25 = vector.broadcast %cst_6 : f32 to vector<4x256xf32>
    %26 = tpu.concatenate %7, %24, %25 in 0 : vector<4x256xf32>, vector<32x256xf32>, vector<4x256xf32> -> vector<40x256xf32>
    %27 = tpu.iota {dimensions = array<i32: 1>} : vector<1x256xi32>
    %c15_i32 = arith.constant 15 : i32
    %28 = vector.broadcast %c15_i32 : i32 to vector<1x256xi32>
    %29 = arith.andi %27, %28 : vector<1x256xi32>
    %c17_i32 = arith.constant 17 : i32
    %30 = tpu.dynamic_rotate %26 by %c17_i32 dim 1 : vector<40x256xf32>, i32 -> vector<40x256xf32>
    %c16_i32 = arith.constant 16 : i32
    %31 = vector.broadcast %c16_i32 : i32 to vector<1x256xi32>
    %32 = arith.cmpi sge, %27, %31 : vector<1x256xi32>
    %c1_i32 = arith.constant 1 : i32
    %33 = vector.broadcast %c1_i32 : i32 to vector<1x256xi32>
    %34 = arith.cmpi sge, %29, %33 : vector<1x256xi32>
    %35 = arith.andi %32, %34 : vector<1x256xi1>
    %cst_7 = arith.constant 0.000000e+00 : f32
    %36 = vector.shape_cast %35 : vector<1x256xi1> to vector<1x256xi1>
    %37 = vector.broadcast %36 : vector<1x256xi1> to vector<40x256xi1>
    %38 = vector.broadcast %cst_7 : f32 to vector<40x256xf32>
    %39 = arith.select %37, %30, %38 : vector<40x256xi1>, vector<40x256xf32>
    %c16_i32_8 = arith.constant 16 : i32
    %40 = tpu.dynamic_rotate %26 by %c16_i32_8 dim 1 : vector<40x256xf32>, i32 -> vector<40x256xf32>
    %c16_i32_9 = arith.constant 16 : i32
    %41 = vector.broadcast %c16_i32_9 : i32 to vector<1x256xi32>
    %42 = arith.cmpi sge, %27, %41 : vector<1x256xi32>
    %cst_10 = arith.constant 0.000000e+00 : f32
    %43 = vector.shape_cast %42 : vector<1x256xi1> to vector<1x256xi1>
    %44 = vector.broadcast %43 : vector<1x256xi1> to vector<40x256xi1>
    %45 = vector.broadcast %cst_10 : f32 to vector<40x256xf32>
    %46 = arith.select %44, %40, %45 : vector<40x256xi1>, vector<40x256xf32>
    %c15_i32_11 = arith.constant 15 : i32
    %47 = tpu.dynamic_rotate %26 by %c15_i32_11 dim 1 : vector<40x256xf32>, i32 -> vector<40x256xf32>
    %c16_i32_12 = arith.constant 16 : i32
    %48 = vector.broadcast %c16_i32_12 : i32 to vector<1x256xi32>
    %49 = arith.cmpi sge, %27, %48 : vector<1x256xi32>
    %c15_i32_13 = arith.constant 15 : i32
    %50 = vector.broadcast %c15_i32_13 : i32 to vector<1x256xi32>
    %51 = arith.cmpi slt, %29, %50 : vector<1x256xi32>
    %52 = arith.andi %49, %51 : vector<1x256xi1>
    %cst_14 = arith.constant 0.000000e+00 : f32
    %53 = vector.shape_cast %52 : vector<1x256xi1> to vector<1x256xi1>
    %54 = vector.broadcast %53 : vector<1x256xi1> to vector<40x256xi1>
    %55 = vector.broadcast %cst_14 : f32 to vector<40x256xf32>
    %56 = arith.select %54, %47, %55 : vector<40x256xi1>, vector<40x256xf32>
    %c1_i32_15 = arith.constant 1 : i32
    %57 = tpu.dynamic_rotate %26 by %c1_i32_15 dim 1 : vector<40x256xf32>, i32 -> vector<40x256xf32>
    %c1_i32_16 = arith.constant 1 : i32
    %58 = vector.broadcast %c1_i32_16 : i32 to vector<1x256xi32>
    %59 = arith.cmpi sge, %29, %58 : vector<1x256xi32>
    %cst_17 = arith.constant 0.000000e+00 : f32
    %60 = vector.shape_cast %59 : vector<1x256xi1> to vector<1x256xi1>
    %61 = vector.broadcast %60 : vector<1x256xi1> to vector<40x256xi1>
    %62 = vector.broadcast %cst_17 : f32 to vector<40x256xf32>
    %63 = arith.select %61, %57, %62 : vector<40x256xi1>, vector<40x256xf32>
    %c255_i32 = arith.constant 255 : i32
    %64 = tpu.dynamic_rotate %26 by %c255_i32 dim 1 : vector<40x256xf32>, i32 -> vector<40x256xf32>
    %c15_i32_18 = arith.constant 15 : i32
    %65 = vector.broadcast %c15_i32_18 : i32 to vector<1x256xi32>
    %66 = arith.cmpi slt, %29, %65 : vector<1x256xi32>
    %cst_19 = arith.constant 0.000000e+00 : f32
    %67 = vector.shape_cast %66 : vector<1x256xi1> to vector<1x256xi1>
    %68 = vector.broadcast %67 : vector<1x256xi1> to vector<40x256xi1>
    %69 = vector.broadcast %cst_19 : f32 to vector<40x256xf32>
    %70 = arith.select %68, %64, %69 : vector<40x256xi1>, vector<40x256xf32>
    %c241_i32 = arith.constant 241 : i32
    %71 = tpu.dynamic_rotate %26 by %c241_i32 dim 1 : vector<40x256xf32>, i32 -> vector<40x256xf32>
    %c240_i32 = arith.constant 240 : i32
    %72 = vector.broadcast %c240_i32 : i32 to vector<1x256xi32>
    %73 = arith.cmpi slt, %27, %72 : vector<1x256xi32>
    %c1_i32_20 = arith.constant 1 : i32
    %74 = vector.broadcast %c1_i32_20 : i32 to vector<1x256xi32>
    %75 = arith.cmpi sge, %29, %74 : vector<1x256xi32>
    %76 = arith.andi %73, %75 : vector<1x256xi1>
    %cst_21 = arith.constant 0.000000e+00 : f32
    %77 = vector.shape_cast %76 : vector<1x256xi1> to vector<1x256xi1>
    %78 = vector.broadcast %77 : vector<1x256xi1> to vector<40x256xi1>
    %79 = vector.broadcast %cst_21 : f32 to vector<40x256xf32>
    %80 = arith.select %78, %71, %79 : vector<40x256xi1>, vector<40x256xf32>
    %c240_i32_22 = arith.constant 240 : i32
    %81 = tpu.dynamic_rotate %26 by %c240_i32_22 dim 1 : vector<40x256xf32>, i32 -> vector<40x256xf32>
    %c240_i32_23 = arith.constant 240 : i32
    %82 = vector.broadcast %c240_i32_23 : i32 to vector<1x256xi32>
    %83 = arith.cmpi slt, %27, %82 : vector<1x256xi32>
    %cst_24 = arith.constant 0.000000e+00 : f32
    %84 = vector.shape_cast %83 : vector<1x256xi1> to vector<1x256xi1>
    %85 = vector.broadcast %84 : vector<1x256xi1> to vector<40x256xi1>
    %86 = vector.broadcast %cst_24 : f32 to vector<40x256xf32>
    %87 = arith.select %85, %81, %86 : vector<40x256xi1>, vector<40x256xf32>
    %c239_i32 = arith.constant 239 : i32
    %88 = tpu.dynamic_rotate %26 by %c239_i32 dim 1 : vector<40x256xf32>, i32 -> vector<40x256xf32>
    %c240_i32_25 = arith.constant 240 : i32
    %89 = vector.broadcast %c240_i32_25 : i32 to vector<1x256xi32>
    %90 = arith.cmpi slt, %27, %89 : vector<1x256xi32>
    %c15_i32_26 = arith.constant 15 : i32
    %91 = vector.broadcast %c15_i32_26 : i32 to vector<1x256xi32>
    %92 = arith.cmpi slt, %29, %91 : vector<1x256xi32>
    %93 = arith.andi %90, %92 : vector<1x256xi1>
    %cst_27 = arith.constant 0.000000e+00 : f32
    %94 = vector.shape_cast %93 : vector<1x256xi1> to vector<1x256xi1>
    %95 = vector.broadcast %94 : vector<1x256xi1> to vector<40x256xi1>
    %96 = vector.broadcast %cst_27 : f32 to vector<40x256xf32>
    %97 = arith.select %95, %88, %96 : vector<40x256xi1>, vector<40x256xf32>
    %98 = tpu.concatenate %39, %46, %56, %63, %26, %70, %80, %87, %97 in 0 : vector<40x256xf32>, vector<40x256xf32>, vector<40x256xf32>, vector<40x256xf32>, vector<40x256xf32>, vector<40x256xf32>, vector<40x256xf32>, vector<40x256xf32>, vector<40x256xf32> -> vector<360x256xf32>
    %c0_28 = arith.constant 0 : index
    %c0_29 = arith.constant 0 : index
    %99 = vector.load %arg2[%c0_28, %c0_29] : memref<8x360xf32, #tpu.memory_space<vmem>>, vector<8x360xf32>
    %cst_30 = arith.constant dense<0.000000e+00> : vector<8x256xf32>
    %100 = tpu.matmul %99, %98, %cst_30 {dimension_numbers = #tpu.dot_dimension_numbers<[1], [0], [0], [1], [0, 0, 1, 1], [], []>} : vector<8x360xf32>, vector<360x256xf32>, vector<8x256xf32> -> vector<8x256xf32>
    %c0_31 = arith.constant 0 : index
    %c0_32 = arith.constant 0 : index
    %101 = vector.load %arg3[%c0_31, %c0_32] : memref<8x1xf32, #tpu.memory_space<vmem>>, vector<8x1xf32>
    %102 = vector.broadcast %101 : vector<8x1xf32> to vector<8x256xf32>
    %103 = arith.addf %100, %102 : vector<8x256xf32>
    %c0_33 = arith.constant 0 : index
    %c0_34 = arith.constant 0 : index
    %c0_35 = arith.constant 0 : index
    %104 = vector.load %arg4[%c0_33, %c0_34, %c0_35] : memref<1x8x256xf32, #tpu.memory_space<vmem>>, vector<1x8x256xf32>
    %105 = vector.shape_cast %104 : vector<1x8x256xf32> to vector<8x256xf32>
    %106 = vector.shape_cast %103 : vector<8x256xf32> to vector<1x8x256xf32>
    tpu.vector_store %arg4[%c0_33, %c0_34, %c0_35], %106 {strides = array<i32>} : memref<1x8x256xf32, #tpu.memory_space<vmem>>, vector<1x8x256xf32>,
    %cst_36 = arith.constant dense<0.000000e+00> : vector<8xf32>
    %107 = vector.multi_reduction <add>, %103, %cst_36 [1] : vector<8x256xf32> to vector<8xf32>
    %108 = vector.shape_cast %107 : vector<8xf32> to vector<8x1xf32>
    %c0_37 = arith.constant 0 : index
    %c0_38 = arith.constant 0 : index
    %c0_39 = arith.constant 0 : index
    %109 = vector.load %arg5[%c0_37, %c0_38, %c0_39] : memref<1x8x1xf32, #tpu.memory_space<vmem>>, vector<1x8x1xf32>
    %110 = vector.shape_cast %109 : vector<1x8x1xf32> to vector<8x1xf32>
    %111 = vector.shape_cast %108 : vector<8x1xf32> to vector<1x8x1xf32>
    tpu.vector_store %arg5[%c0_37, %c0_38, %c0_39], %111 {strides = array<i32>} : memref<1x8x1xf32, #tpu.memory_space<vmem>>, vector<1x8x1xf32>,
    %112 = arith.mulf %103, %103 : vector<8x256xf32>
    %cst_40 = arith.constant dense<0.000000e+00> : vector<8xf32>
    %113 = vector.multi_reduction <add>, %112, %cst_40 [1] : vector<8x256xf32> to vector<8xf32>
    %114 = vector.shape_cast %113 : vector<8xf32> to vector<8x1xf32>
    %c0_41 = arith.constant 0 : index
    %c0_42 = arith.constant 0 : index
    %c0_43 = arith.constant 0 : index
    %115 = vector.load %arg6[%c0_41, %c0_42, %c0_43] : memref<1x8x1xf32, #tpu.memory_space<vmem>>, vector<1x8x1xf32>
    %116 = vector.shape_cast %115 : vector<1x8x1xf32> to vector<8x1xf32>
    %117 = vector.shape_cast %114 : vector<8x1xf32> to vector<1x8x1xf32>
    tpu.vector_store %arg6[%c0_41, %c0_42, %c0_43], %117 {strides = array<i32>} : memref<1x8x1xf32, #tpu.memory_space<vmem>>, vector<1x8x1xf32>,
    return
  }
  func.func @transform_0(%arg0: i32) -> (i32, i32, i32) {
    %c0_i32 = arith.constant 0 : i32
    %c0_i32_0 = arith.constant 0 : i32
    %c0_i32_1 = arith.constant 0 : i32
    return %arg0, %c0_i32, %c0_i32_0 : i32, i32, i32
  }
  func.func @transform_1(%arg0: i32) -> (i32, i32) {
    %c0_i32 = arith.constant 0 : i32
    %c0_i32_0 = arith.constant 0 : i32
    %c0_i32_1 = arith.constant 0 : i32
    return %c0_i32, %c0_i32_0 : i32, i32
  }
  func.func @transform_2(%arg0: i32) -> (i32, i32) {
    %c0_i32 = arith.constant 0 : i32
    %c0_i32_0 = arith.constant 0 : i32
    %c0_i32_1 = arith.constant 0 : i32
    return %c0_i32, %c0_i32_0 : i32, i32
  }
  func.func @transform_3(%arg0: i32) -> (i32, i32, i32) {
    %c0_i32 = arith.constant 0 : i32
    %c0_i32_0 = arith.constant 0 : i32
    %c0_i32_1 = arith.constant 0 : i32
    return %arg0, %c0_i32, %c0_i32_0 : i32, i32, i32
  }
  func.func @transform_4(%arg0: i32) -> (i32, i32, i32) {
    %c0_i32 = arith.constant 0 : i32
    %c0_i32_0 = arith.constant 0 : i32
    %c0_i32_1 = arith.constant 0 : i32
    return %arg0, %c0_i32, %c0_i32_0 : i32, i32, i32
  }
  func.func @transform_5(%arg0: i32) -> (i32, i32, i32) {
    %c0_i32 = arith.constant 0 : i32
    %c0_i32_0 = arith.constant 0 : i32
    %c0_i32_1 = arith.constant 0 : i32
    return %arg0, %c0_i32, %c0_i32_0 : i32, i32, i32
  }
}

</mosaic_0001>

<llo_original>
// kernel: tpu_custom_call.1
$region0: #{tpu_custom_call.1}
  #allocation0 [shape = 'u32[]', space=smem, size = 0x4, offset = 0x4, fixed_abs, tag = 'smem constant byte address 0x4 - core index']
  #allocation1 [shape = 'u32[144,128]{1,0:T(1,128)}', space=vmem, size = 0x12000, scoped, tag = 'internal scratch']
  %s0 = inlined_call_operand.hbm [shape: f32[2,4,256], index: 0, kind: input, shape index: {}]
  %s1 = inlined_call_operand.hbm [shape: f32[8,360], index: 1, kind: input, shape index: {}]
  %s2 = inlined_call_operand.vmem [shape: f32[8,1], index: 2, kind: input, shape index: {}]
  %s3 = inlined_call_operand.hbm [shape: f32[2,8,256], index: 3, kind: output, shape index: {0}]
  %s4 = inlined_call_operand.vmem [shape: f32[2,8,1], index: 4, kind: output, shape index: {1}]
  %s5 = inlined_call_operand.vmem [shape: f32[2,8,1], index: 5, kind: output, shape index: {2}]
  %6 = xla_tuple %s3, %s4, %s5
  %s7 = sld [smem:[#allocation0]]
  $region69: #{tpu_custom_call.1} parent=0
    _
  %s9 = ssub.s32 1, %s7
  %s10 = scalar_select 0, %s9, %s7
  $region1: #{tpu_custom_call.1} parent=0
    #allocation2 [shape = 'u8[8192]{0}', space=vmem, size = 0x2000, scoped, tag = 'input window, operand 0']
    #allocation3 [shape = 's32[2]{0}', space=sflag, size = 0x8, scoped, tag = 'scoped memory for tpu_custom_call.1']
    #allocation4 [shape = 's32[2]{0}', space=sflag, size = 0x8, scoped, tag = 'scoped memory for tpu_custom_call.1']
    #allocation5 [shape = 'u8[12288]{0}', space=vmem, size = 0x3000, scoped, tag = 'input window, operand 1, single buffered']
    #allocation6 [shape = 's32[1]{0}', space=sflag, size = 0x4, scoped, tag = 'scoped memory for tpu_custom_call.1']
    #allocation7 [shape = 'u8[16384]{0}', space=vmem, size = 0x4000, scoped, tag = 'output window, operand 0']
    %11 = vsyncpa [#allocation3], 0
    %s12 = scalar_lea.sflag [#allocation3], 1
    %13 = vsyncpa %s12, 0
    %14 = vsyncpa [#allocation6], 0
    %15 = vsyncpa [#allocation4], 0
    %s16 = scalar_lea.sflag [#allocation4], 1
    %17 = vsyncpa %s16, 0
    loop: start=0, step=1, limit=4
    $region2: #{tpu_custom_call.1} parent=1 // loop_pre_header
      _
    $region3: #{tpu_custom_call.1} parent=1 // loop_header
      %s19 = sphi 0, %s23
      %p20 = scmp.ge.s32.totalorder %s19, 4
      %s29 = sphi 0, %s31
      %s32 = sphi 0, %s29
      %s33 = sphi 0, %s32
      %s49 = sphi 0, %s33
      %s53 = sphi 0, %s53
      %s55 = sphi 0, %s53
      %s56 = sphi 0, %s55
      %s70 = sphi 0, %s56
      %s74 = sphi 0, %s74
      %s76 = sphi 0, %s74
      %s77 = sphi 0, %s76
      %s91 = sphi 0, %s77
      %s97 = sphi 0, %s99
      %s100 = sphi 0, %s97
      %s101 = sphi 0, %s100
      %s117 = sphi 0, %s101
      %s123 = sphi 0, %s125
      %s126 = sphi 0, %s123
      %s127 = sphi 0, %s126
      %s143 = sphi 0, %s127
      %s149 = sphi 0, %s151
      %s152 = sphi 0, %s149
      %s153 = sphi 0, %s152
      %s169 = sphi 0, %s153
    $region4: #{tpu_custom_call.1} parent=1 // loop_header_branch
      %22 = sbr.rel (%p20) target = $region8
    $region5: #{tpu_custom_call.1} parent=1 // loop_body
      %s24 = ssub.s32 %s19, 1
      %s25 = ssub.s32 %s19, 2
      %s26 = sadd.s32 %s19, 1
      %s27 = ssub.s32 %s19, %s26
      %p28 = scmp.eq.s32.totalorder %s27, 0
      %s30 = sadd.s32 %s29, 1
      %s31 = scalar_select %p28, %s29, %s30
      %p34 = pneg %p28
      %p35 = scmp.eq.s32.totalorder %s19, 1
      %p36 = por %p34, %p35
      %p37 = scmp.ne.s32.totalorder %s29, %s32
      %p38 = scmp.eq.s32.totalorder %s19, 0
      %p39 = por %p37, %p38
      %p40 = scmp.ne.s32.totalorder %s29, %s32
      %p41 = scmp.eq.s32.totalorder %s24, 1
      %p42 = por %p40, %p41
      %p43 = scmp.ne.s32.totalorder %s32, %s33
      %p44 = scmp.eq.s32.totalorder %s24, 0
      %p45 = por %p43, %p44
      %p46 = scmp.ne.s32.totalorder %s32, %s33
      %p47 = scmp.eq.s32.totalorder %s25, 1
      %p48 = por %p46, %p47
      %p50 = scmp.ne.s32.totalorder %s33, %s49
      %p51 = scmp.eq.s32.totalorder %s25, 0
      %p52 = por %p50, %p51
      %s54 = sadd.s32 %s53, 1
      %p57 = scmp.eq.s32.totalorder %s19, 1
      %p58 = scmp.ne.s32.totalorder %s53, %s55
      %p59 = scmp.eq.s32.totalorder %s19, 0
      %p60 = por %p58, %p59
      %p61 = scmp.ne.s32.totalorder %s53, %s55
      %p62 = scmp.eq.s32.totalorder %s24, 1
      %p63 = por %p61, %p62
      %p64 = scmp.ne.s32.totalorder %s55, %s56
      %p65 = scmp.eq.s32.totalorder %s24, 0
      %p66 = por %p64, %p65
      %p67 = scmp.ne.s32.totalorder %s55, %s56
      %p68 = scmp.eq.s32.totalorder %s25, 1
      %p69 = por %p67, %p68
      %p71 = scmp.ne.s32.totalorder %s56, %s70
      %p72 = scmp.eq.s32.totalorder %s25, 0
      %p73 = por %p71, %p72
      %s75 = sadd.s32 %s74, 1
      %p78 = scmp.eq.s32.totalorder %s19, 1
      %p79 = scmp.ne.s32.totalorder %s74, %s76
      %p80 = scmp.eq.s32.totalorder %s19, 0
      %p81 = por %p79, %p80
      %p82 = scmp.ne.s32.totalorder %s74, %s76
      %p83 = scmp.eq.s32.totalorder %s24, 1
      %p84 = por %p82, %p83
      %p85 = scmp.ne.s32.totalorder %s76, %s77
      %p86 = scmp.eq.s32.totalorder %s24, 0
      %p87 = por %p85, %p86
      %p88 = scmp.ne.s32.totalorder %s76, %s77
      %p89 = scmp.eq.s32.totalorder %s25, 1
      %p90 = por %p88, %p89
      %p92 = scmp.ne.s32.totalorder %s77, %s91
      %p93 = scmp.eq.s32.totalorder %s25, 0
      %p94 = por %p92, %p93
      %s95 = ssub.s32 %s19, %s26
      %p96 = scmp.eq.s32.totalorder %s95, 0
      %s98 = sadd.s32 %s97, 1
      %s99 = scalar_select %p96, %s97, %s98
      %p102 = pneg %p96
      %p103 = scmp.eq.s32.totalorder %s19, 1
      %p104 = por %p102, %p103
      %p105 = scmp.ne.s32.totalorder %s97, %s100
      %p106 = scmp.eq.s32.totalorder %s19, 0
      %p107 = por %p105, %p106
      %p108 = scmp.ne.s32.totalorder %s97, %s100
      %p109 = scmp.eq.s32.totalorder %s24, 1
      %p110 = por %p108, %p109
      %p111 = scmp.ne.s32.totalorder %s100, %s101
      %p112 = scmp.eq.s32.totalorder %s24, 0
      %p113 = por %p111, %p112
      %p114 = scmp.ne.s32.totalorder %s100, %s101
      %p115 = scmp.eq.s32.totalorder %s25, 1
      %p116 = por %p114, %p115
      %p118 = scmp.ne.s32.totalorder %s101, %s117
      %p119 = scmp.eq.s32.totalorder %s25, 0
      %p120 = por %p118, %p119
      %s121 = ssub.s32 %s19, %s26
      %p122 = scmp.eq.s32.totalorder %s121, 0
      %s124 = sadd.s32 %s123, 1
      %s125 = scalar_select %p122, %s123, %s124
      %p128 = pneg %p122
      %p129 = scmp.eq.s32.totalorder %s19, 1
      %p130 = por %p128, %p129
      %p131 = scmp.ne.s32.totalorder %s123, %s126
      %p132 = scmp.eq.s32.totalorder %s19, 0
      %p133 = por %p131, %p132
      %p134 = scmp.ne.s32.totalorder %s123, %s126
      %p135 = scmp.eq.s32.totalorder %s24, 1
      %p136 = por %p134, %p135
      %p137 = scmp.ne.s32.totalorder %s126, %s127
      %p138 = scmp.eq.s32.totalorder %s24, 0
      %p139 = por %p137, %p138
      %p140 = scmp.ne.s32.totalorder %s126, %s127
      %p141 = scmp.eq.s32.totalorder %s25, 1
      %p142 = por %p140, %p141
      %p144 = scmp.ne.s32.totalorder %s127, %s143
      %p145 = scmp.eq.s32.totalorder %s25, 0
      %p146 = por %p144, %p145
      %s147 = ssub.s32 %s19, %s26
      %p148 = scmp.eq.s32.totalorder %s147, 0
      %s150 = sadd.s32 %s149, 1
      %s151 = scalar_select %p148, %s149, %s150
      %p154 = pneg %p148
      %p155 = scmp.eq.s32.totalorder %s19, 1
      %p156 = por %p154, %p155
      %p157 = scmp.ne.s32.totalorder %s149, %s152
      %p158 = scmp.eq.s32.totalorder %s19, 0
      %p159 = por %p157, %p158
      %p160 = scmp.ne.s32.totalorder %s149, %s152
      %p161 = scmp.eq.s32.totalorder %s24, 1
      %p162 = por %p160, %p161
      %p163 = scmp.ne.s32.totalorder %s152, %s153
      %p164 = scmp.eq.s32.totalorder %s24, 0
      %p165 = por %p163, %p164
      %p166 = scmp.ne.s32.totalorder %s152, %s153
      %p167 = scmp.eq.s32.totalorder %s25, 1
      %p168 = por %p166, %p167
      %p170 = scmp.ne.s32.totalorder %s153, %s169
      %p171 = scmp.eq.s32.totalorder %s25, 0
      %p172 = por %p170, %p171
      %p173 = scmp.le.s32.totalorder 1, %s19
      %p174 = scmp.lt.s32.totalorder %s19, 3
      %p175 = pnand %p173, %p174
      %p176 = pneg %p175
      // Predicated region
      $region9: #{tpu_custom_call.1} parent=5 // pred_check
        _
      $region10: #{tpu_custom_call.1} parent=5 // pred_check_branch
        %178 = sbr.rel (%p175) target = $region12
      $region11: #{tpu_custom_call.1} parent=5 // pred_region
        %s179 = ssub.s32 %s19, 1
        // Predicated region
        $region13: #{tpu_custom_call.1} parent=11 // pred_check
          %p180 = pneg %p66
        $region14: #{tpu_custom_call.1} parent=11 // pred_check_branch
          %182 = sbr.rel (%p180) target = $region16
        $region15: #{tpu_custom_call.1} parent=11 // pred_region
          %s184 = ssub.s32 384, 384
          %185 = vsyncadd [#allocation6], %s184
          %s187 = sshll.u32 [#allocation5], 4
          %s188 = int_to_ptr.vmem [resolvable:$true] %s187
          %190 = dma.hbm_to_vmem [thread:$0]  %s1, 384, %s188, [#allocation6]
        $region16: #{tpu_custom_call.1} parent=11 // pred_fallthru
          _
        // Predicated region
        $region17: #{tpu_custom_call.1} parent=11 // pred_check
          %p191 = pneg %p87
        $region18: #{tpu_custom_call.1} parent=11 // pred_check_branch
          %193 = sbr.rel (%p191) target = $region20
        $region19: #{tpu_custom_call.1} parent=11 // pred_region
          _
        $region20: #{tpu_custom_call.1} parent=11 // pred_fallthru
          _
      $region12: #{tpu_custom_call.1} parent=5 // pred_fallthru
        _
      %p194 = scmp.lt.s32.totalorder %s19, 2
      // Predicated region
      $region21: #{tpu_custom_call.1} parent=5 // pred_check
        %p195 = pneg %p194
      $region22: #{tpu_custom_call.1} parent=5 // pred_check_branch
        %197 = sbr.rel (%p195) target = $region24
      $region23: #{tpu_custom_call.1} parent=5 // pred_region
        // Predicated region
        $region25: #{tpu_custom_call.1} parent=23 // pred_check
          %p198 = pneg %p39
        $region26: #{tpu_custom_call.1} parent=23 // pred_check_branch
          %200 = sbr.rel (%p198) target = $region28
        $region27: #{tpu_custom_call.1} parent=23 // pred_region
          %s201 = sand.u32 %s29, 1
          %s202 = scalar_lea.sflag [#allocation3], %s201
          %s203 = sand.u32 %s29, 1
          %s204 = smul.addr %s203, 8
          %s205 = scalar_lea.vmem [#allocation2], %s204
          %s207 = ssub.s32 128, 128
          %208 = vsyncadd %s202, %s207
          %s209 = smul.addr %s19, 2
          %s210 = smul.addr %s209, 64
          %s211 = scalar_lea.hbm %s0, %s210
          %s213 = sshll.u32 %s205, 4
          %s214 = int_to_ptr.vmem [resolvable:$true] %s213
          %216 = dma.hbm_to_vmem [thread:$0]  %s211, 128, %s214, %s202
        $region28: #{tpu_custom_call.1} parent=23 // pred_fallthru
          _
      $region24: #{tpu_custom_call.1} parent=5 // pred_fallthru
        _
      %p217 = scmp.le.s32.totalorder 1, %s19
      %p218 = scmp.lt.s32.totalorder %s19, 3
      %p219 = pnand %p217, %p218
      %p220 = pneg %p219
      // Predicated region
      $region29: #{tpu_custom_call.1} parent=5 // pred_check
        _
      $region30: #{tpu_custom_call.1} parent=5 // pred_check_branch
        %222 = sbr.rel (%p219) target = $region32
      $region31: #{tpu_custom_call.1} parent=5 // pred_region
        %s223 = ssub.s32 %s19, 1
        %s224 = sand.u32 %s32, 1
        %s225 = scalar_lea.sflag [#allocation3], %s224
        %s226 = sand.u32 %s32, 1
        %s227 = smul.addr %s226, 8
        %s228 = scalar_lea.vmem [#allocation2], %s227
        // Predicated region
        $region33: #{tpu_custom_call.1} parent=31 // pred_check
          %p229 = pneg %p45
        $region34: #{tpu_custom_call.1} parent=31 // pred_check_branch
          %231 = sbr.rel (%p229) target = $region36
        $region35: #{tpu_custom_call.1} parent=31 // pred_region
          %232 = dma.done %s225, 128
        $region36: #{tpu_custom_call.1} parent=31 // pred_fallthru
          _
        // Predicated region
        $region37: #{tpu_custom_call.1} parent=31 // pred_check
          %p233 = pneg %p66
        $region38: #{tpu_custom_call.1} parent=31 // pred_check_branch
          %235 = sbr.rel (%p233) target = $region40
        $region39: #{tpu_custom_call.1} parent=31 // pred_region
          %236 = dma.done [#allocation6], 384
        $region40: #{tpu_custom_call.1} parent=31 // pred_fallthru
          _
        %s237 = sand.u32 %s32, 1
        %s238 = scalar_lea.sflag [#allocation3], %s237
        %s239 = sand.u32 %s32, 1
        %s240 = smul.addr %s239, 8
        %s241 = scalar_lea.vmem [#allocation2], %s240
        %p242 = pneg %p45
        %p243 = pneg %p42
        %p244 = pneg %p66
        %p245 = pneg %p63
        %p246 = pneg %p87
        %p247 = pneg %p84
        %p248 = pneg %p113
        %p249 = pneg %p110
        %s250 = sand.u32 %s100, 1
        %s251 = scalar_lea.sflag [#allocation4], %s250
        %s252 = sand.u32 %s100, 1
        %s253 = smul.addr %s252, 16
        %s254 = scalar_lea.vmem [#allocation7], %s253
        %p255 = pneg %p139
        %p256 = pneg %p136
        %p257 = scmp.lt.s32.totalorder %s24, 1
        %s258 = scalar_select %p257, %s24, 1
        %s259 = smul.addr %s258, 8
        %s260 = scalar_lea.vmem %s4, %s259
        %p261 = pneg %p165
        %p262 = pneg %p162
        %p263 = scmp.lt.s32.totalorder %s24, 1
        %s264 = scalar_select %p263, %s24, 1
        %s265 = smul.addr %s264, 8
        %s266 = scalar_lea.vmem %s5, %s265
        %p267 = scmp.lt.s32.totalorder %s24, 1
        %s268 = scalar_select %p267, %s24, 1
        %s269 = smul.addr %s268, 8
        %s270 = scalar_lea.vmem %s4, %s269
        %p271 = scmp.lt.s32.totalorder %s24, 1
        %s272 = scalar_select %p271, %s24, 1
        %s273 = smul.addr %s272, 8
        %s274 = scalar_lea.vmem %s5, %s273
        %v275 = vld [vmem:[%s228] sm:$0xff]
        %v276 = vxor.u32 %v275, 2147483648
        %v277 = vmul.f32 %v276, 1.442695
        %v278 = vpow.pop %v277
        %v279 = vadd.f32 %v278, 1.0
        %v280 = vrcp.pop %v279
        %v281 = vmul.f32 1.0, %v280
        %v282 = vmul.f32 %v275, %v281
        %v283 = vlaneseq
        %v284 = vshrl.u32 %v283, 7
        %v285 = vcvt.s32.f32 %v284
        %v286 = vmul.f32 %v285, 0.5714286
        %v287 = vadd.f32 %v286, -2.0
        %v290 = vunpack.c.l.s4 1966171168
        %v291 = vunpack.c.0.s8 %v290
        %v292 = vlaneseq
        %v293 = vshrl.u32 %v292, 7
        %v294 = vsub.s32 %v291, %v293
        %v295 = vrot.slane %v275, %v294
        %v296 = vcombine.high %v295, %v295
        %v298 = vunpack.c.l.s4 1966171168
        %v299 = vunpack.c.0.s8 %v298
        %v300 = vlaneseq
        %v301 = vshrl.u32 %v300, 7
        %v302 = vsub.s32 %v299, %v301
        %v303 = vrot.slane %v295, %v302
        %v305 = vunpack.c.l.s4 1966171168
        %v306 = vunpack.c.0.s8 %v305
        %v307 = vlaneseq
        %v308 = vshrl.u32 %v307, 7
        %v309 = vsub.s32 %v306, %v308
        %v310 = vrot.slane %v296, %v309
        %v311 = vcombine.high %v303, %v303
        %v312 = vcombine.high %v310, %v310
        %v313 = vlaneseq
        %v314 = vshrl.u32 %v313, 7
        %v315 = vsub.s32 0, %v314
        %v316 = vrot.slane %v303, %v315
        %v317 = vlaneseq
        %v318 = vshrl.u32 %v317, 7
        %v319 = vsub.s32 1, %v318
        %v320 = vrot.slane %v303, %v319
        %v321 = vlaneseq
        %v322 = vshrl.u32 %v321, 7
        %v323 = vsub.s32 0, %v322
        %v324 = vrot.slane %v310, %v323
        %v325 = vlaneseq
        %v326 = vshrl.u32 %v325, 7
        %v327 = vsub.s32 1, %v326
        %v328 = vrot.slane %v310, %v327
        %v329 = vlaneseq
        %v330 = vshrl.u32 %v329, 7
        %v331 = vsub.s32 0, %v330
        %v332 = vrot.slane %v311, %v331
        %v333 = vlaneseq
        %v334 = vshrl.u32 %v333, 7
        %v335 = vsub.s32 1, %v334
        %v336 = vrot.slane %v311, %v335
        %v337 = vlaneseq
        %v338 = vshrl.u32 %v337, 7
        %v339 = vsub.s32 0, %v338
        %v340 = vrot.slane %v312, %v339
        %v341 = vlaneseq
        %v342 = vshrl.u32 %v341, 7
        %v343 = vsub.s32 1, %v342
        %v344 = vrot.slane %v312, %v343
        %v353 = vsub.f32 %v316, %v287
        %v354 = vsub.f32 %v320, %v287
        %v355 = vsub.f32 %v324, %v287
        %v356 = vsub.f32 %v328, %v287
        %v357 = vsub.f32 %v332, %v287
        %v358 = vsub.f32 %v336, %v287
        %v359 = vsub.f32 %v340, %v287
        %v360 = vsub.f32 %v344, %v287
        %v361 = vrcp.pop 0.5714286
        %v362 = vmul.f32 %v353, %v361
        %v363 = vmul.f32 %v354, %v361
        %v364 = vmul.f32 %v355, %v361
        %v365 = vmul.f32 %v356, %v361
        %v366 = vmul.f32 %v357, %v361
        %v367 = vmul.f32 %v358, %v361
        %v368 = vmul.f32 %v359, %v361
        %v369 = vmul.f32 %v360, %v361
        %v370 = vsub.f32 0.0, %v362
        %v371 = vsub.f32 0.0, %v363
        %v372 = vsub.f32 0.0, %v364
        %v373 = vsub.f32 0.0, %v365
        %v374 = vsub.f32 0.0, %v366
        %v375 = vsub.f32 0.0, %v367
        %v376 = vsub.f32 0.0, %v368
        %v377 = vsub.f32 0.0, %v369
        %v378 = vmul.f32 %v370, %v362
        %v379 = vmul.f32 %v371, %v363
        %v380 = vmul.f32 %v372, %v364
        %v381 = vmul.f32 %v373, %v365
        %v382 = vmul.f32 %v374, %v366
        %v383 = vmul.f32 %v375, %v367
        %v384 = vmul.f32 %v376, %v368
        %v385 = vmul.f32 %v377, %v369
        %v386 = vmul.f32 %v378, 1.442695
        %v387 = vpow.pop %v386
        %v388 = vmul.f32 %v379, 1.442695
        %v389 = vpow.pop %v388
        %v390 = vmul.f32 %v380, 1.442695
        %v391 = vpow.pop %v390
        %v392 = vmul.f32 %v381, 1.442695
        %v393 = vpow.pop %v392
        %v394 = vmul.f32 %v382, 1.442695
        %v395 = vpow.pop %v394
        %v396 = vmul.f32 %v383, 1.442695
        %v397 = vpow.pop %v396
        %v398 = vmul.f32 %v384, 1.442695
        %v399 = vpow.pop %v398
        %v400 = vmul.f32 %v385, 1.442695
        %v401 = vpow.pop %v400
        %v403 = vcombine.high %v282, %v282
        %vm413 = vcmask 1043456
        %v414 = vrot.slane %v387, 4
        %v415 = vrot.slane %v389, 4
        %v416 = vrot.slane %v391, 4
        %v417 = vsel %vm413, %v414, %v416
        %v418 = vrot.slane %v393, 4
        %v419 = vsel %vm413, %v415, %v418
        %v420 = vrot.slane %v395, 4
        %v421 = vsel %vm413, %v416, %v420
        %v422 = vrot.slane %v397, 4
        %v423 = vsel %vm413, %v418, %v422
        %v424 = vrot.slane %v399, 4
        %v425 = vsel %vm413, %v420, %v424
        %v426 = vrot.slane %v401, 4
        %v427 = vsel %vm413, %v422, %v426
        %v438 = vsel %vm413, %v282, %v414
        %v439 = vsel %vm413, %v403, %v415
        %v440 = vsel %vm413, %v424, 0.0
        %v441 = vsel %vm413, %v426, 0.0
        %v442 = vlaneseq
        %v443 = vand.u32 %v442, 127
        %v444 = vadd.s32 %v443, 128
        %v445 = vand.u32 %v443, 15
        %v446 = vand.u32 %v444, 15
        %447 = vrot.lane.b32.xlu0 %v438, 17
        %v448 = vpop.permute.xlu0 %447
        %449 = vrot.lane.b32.xlu0 %v417, 17
        %v450 = vpop.permute.xlu0 %449
        %451 = vrot.lane.b32.xlu0 %v421, 17
        %v452 = vpop.permute.xlu0 %451
        %453 = vrot.lane.b32.xlu0 %v425, 17
        %v454 = vpop.permute.xlu0 %453
        %455 = vrot.lane.b32.xlu0 %v440, 17
        %v456 = vpop.permute.xlu0 %455
        %457 = vrot.lane.b32.xlu0 %v439, 17
        %v458 = vpop.permute.xlu0 %457
        %459 = vrot.lane.b32.xlu0 %v419, 17
        %v460 = vpop.permute.xlu0 %459
        %461 = vrot.lane.b32.xlu0 %v423, 17
        %v462 = vpop.permute.xlu0 %461
        %463 = vrot.lane.b32.xlu0 %v427, 17
        %v464 = vpop.permute.xlu0 %463
        %465 = vrot.lane.b32.xlu0 %v441, 17
        %v466 = vpop.permute.xlu0 %465
        %vm467 = vcmp.lt.s32.totalorder %v443, 17
        %v468 = vsel %vm467, %v448, %v458
        %v469 = vsel %vm467, %v450, %v460
        %v470 = vsel %vm467, %v452, %v462
        %v471 = vsel %vm467, %v454, %v464
        %v472 = vsel %vm467, %v456, %v466
        %v473 = vsel %vm467, %v458, %v448
        %v474 = vsel %vm467, %v460, %v450
        %v475 = vsel %vm467, %v462, %v452
        %v476 = vsel %vm467, %v464, %v454
        %v477 = vsel %vm467, %v466, %v456
        %vm478 = vcmp.ge.s32.totalorder %v443, 16
        %vm479 = vcmp.ge.s32.totalorder %v444, 16
        %vm480 = vcmp.ge.s32.totalorder %v445, 1
        %vm481 = vcmp.ge.s32.totalorder %v446, 1
        %vm482 = vmand %vm478, %vm480
        %vm483 = vmand %vm479, %vm481
        %v484 = vsel %vm482, 1, 0
        %v485 = vsel %vm483, 1, 0
        %vm486 = vcmp.eq.s32.totalorder %v484, 1
        %vm487 = vcmp.eq.s32.totalorder %v485, 1
        %v488 = vsel %vm486, %v473, 0.0
        %v489 = vsel %vm487, %v468, 0.0
        %v490 = vsel %vm486, %v474, 0.0
        %v491 = vsel %vm487, %v469, 0.0
        %v492 = vsel %vm486, %v475, 0.0
        %v493 = vsel %vm487, %v470, 0.0
        %v494 = vsel %vm486, %v476, 0.0
        %v495 = vsel %vm487, %v471, 0.0
        %v496 = vsel %vm486, %v477, 0.0
        %v497 = vsel %vm487, %v472, 0.0
        %498 = vrot.lane.b32.xlu0 %v438, 16
        %v499 = vpop.permute.xlu0 %498
        %500 = vrot.lane.b32.xlu0 %v417, 16
        %v501 = vpop.permute.xlu0 %500
        %502 = vrot.lane.b32.xlu0 %v421, 16
        %v503 = vpop.permute.xlu0 %502
        %504 = vrot.lane.b32.xlu0 %v425, 16
        %v505 = vpop.permute.xlu0 %504
        %506 = vrot.lane.b32.xlu0 %v440, 16
        %v507 = vpop.permute.xlu0 %506
        %508 = vrot.lane.b32.xlu0 %v439, 16
        %v509 = vpop.permute.xlu0 %508
        %510 = vrot.lane.b32.xlu0 %v419, 16
        %v511 = vpop.permute.xlu0 %510
        %512 = vrot.lane.b32.xlu0 %v423, 16
        %v513 = vpop.permute.xlu0 %512
        %514 = vrot.lane.b32.xlu0 %v427, 16
        %v515 = vpop.permute.xlu0 %514
        %516 = vrot.lane.b32.xlu0 %v441, 16
        %v517 = vpop.permute.xlu0 %516
        %vm518 = vcmp.lt.s32.totalorder %v443, 16
        %v519 = vsel %vm518, %v499, %v509
        %v520 = vsel %vm518, %v501, %v511
        %v521 = vsel %vm518, %v503, %v513
        %v522 = vsel %vm518, %v505, %v515
        %v523 = vsel %vm518, %v507, %v517
        %v524 = vsel %vm518, %v509, %v499
        %v525 = vsel %vm518, %v511, %v501
        %v526 = vsel %vm518, %v513, %v503
        %v527 = vsel %vm518, %v515, %v505
        %v528 = vsel %vm518, %v517, %v507
        %v529 = vsel %vm478, 1, 0
        %v530 = vsel %vm479, 1, 0
        %vm531 = vcmp.eq.s32.totalorder %v529, 1
        %vm532 = vcmp.eq.s32.totalorder %v530, 1
        %v533 = vsel %vm531, %v524, 0.0
        %v534 = vsel %vm532, %v519, 0.0
        %v535 = vsel %vm531, %v525, 0.0
        %v536 = vsel %vm532, %v520, 0.0
        %v537 = vsel %vm531, %v526, 0.0
        %v538 = vsel %vm532, %v521, 0.0
        %v539 = vsel %vm531, %v527, 0.0
        %v540 = vsel %vm532, %v522, 0.0
        %v541 = vsel %vm531, %v528, 0.0
        %v542 = vsel %vm532, %v523, 0.0
        %543 = vrot.lane.b32.xlu0 %v438, 15
        %v544 = vpop.permute.xlu0 %543
        %545 = vrot.lane.b32.xlu0 %v417, 15
        %v546 = vpop.permute.xlu0 %545
        %547 = vrot.lane.b32.xlu0 %v421, 15
        %v548 = vpop.permute.xlu0 %547
        %549 = vrot.lane.b32.xlu0 %v425, 15
        %v550 = vpop.permute.xlu0 %549
        %551 = vrot.lane.b32.xlu0 %v440, 15
        %v552 = vpop.permute.xlu0 %551
        %553 = vrot.lane.b32.xlu0 %v439, 15
        %v554 = vpop.permute.xlu0 %553
        %555 = vrot.lane.b32.xlu0 %v419, 15
        %v556 = vpop.permute.xlu0 %555
        %557 = vrot.lane.b32.xlu0 %v423, 15
        %v558 = vpop.permute.xlu0 %557
        %559 = vrot.lane.b32.xlu0 %v427, 15
        %v560 = vpop.permute.xlu0 %559
        %561 = vrot.lane.b32.xlu0 %v441, 15
        %v562 = vpop.permute.xlu0 %561
        %vm563 = vcmp.lt.s32.totalorder %v443, 15
        %v564 = vsel %vm563, %v544, %v554
        %v565 = vsel %vm563, %v546, %v556
        %v566 = vsel %vm563, %v548, %v558
        %v567 = vsel %vm563, %v550, %v560
        %v568 = vsel %vm563, %v552, %v562
        %v569 = vsel %vm563, %v554, %v544
        %v570 = vsel %vm563, %v556, %v546
        %v571 = vsel %vm563, %v558, %v548
        %v572 = vsel %vm563, %v560, %v550
        %v573 = vsel %vm563, %v562, %v552
        %vm574 = vcmp.lt.s32.totalorder %v445, 15
        %vm575 = vcmp.lt.s32.totalorder %v446, 15
        %vm576 = vmand %vm478, %vm574
        %vm577 = vmand %vm479, %vm575
        %v578 = vsel %vm576, 1, 0
        %v579 = vsel %vm577, 1, 0
        %vm580 = vcmp.eq.s32.totalorder %v578, 1
        %vm581 = vcmp.eq.s32.totalorder %v579, 1
        %v582 = vsel %vm580, %v569, 0.0
        %v583 = vsel %vm581, %v564, 0.0
        %v584 = vsel %vm580, %v570, 0.0
        %v585 = vsel %vm581, %v565, 0.0
        %v586 = vsel %vm580, %v571, 0.0
        %v587 = vsel %vm581, %v566, 0.0
        %v588 = vsel %vm580, %v572, 0.0
        %v589 = vsel %vm581, %v567, 0.0
        %v590 = vsel %vm580, %v573, 0.0
        %v591 = vsel %vm581, %v568, 0.0
        %592 = vrot.lane.b32.xlu0 %v438, 1
        %v593 = vpop.permute.xlu0 %592
        %594 = vrot.lane.b32.xlu0 %v417, 1
        %v595 = vpop.permute.xlu0 %594
        %596 = vrot.lane.b32.xlu0 %v421, 1
        %v597 = vpop.permute.xlu0 %596
        %598 = vrot.lane.b32.xlu0 %v425, 1
        %v599 = vpop.permute.xlu0 %598
        %600 = vrot.lane.b32.xlu0 %v440, 1
        %v601 = vpop.permute.xlu0 %600
        %602 = vrot.lane.b32.xlu0 %v439, 1
        %v603 = vpop.permute.xlu0 %602
        %604 = vrot.lane.b32.xlu0 %v419, 1
        %v605 = vpop.permute.xlu0 %604
        %606 = vrot.lane.b32.xlu0 %v423, 1
        %v607 = vpop.permute.xlu0 %606
        %608 = vrot.lane.b32.xlu0 %v427, 1
        %v609 = vpop.permute.xlu0 %608
        %610 = vrot.lane.b32.xlu0 %v441, 1
        %v611 = vpop.permute.xlu0 %610
        %vm612 = vcmp.lt.s32.totalorder %v443, 1
        %v613 = vsel %vm612, %v593, %v603
        %v614 = vsel %vm612, %v595, %v605
        %v615 = vsel %vm612, %v597, %v607
        %v616 = vsel %vm612, %v599, %v609
        %v617 = vsel %vm612, %v601, %v611
        %v618 = vsel %vm612, %v603, %v593
        %v619 = vsel %vm612, %v605, %v595
        %v620 = vsel %vm612, %v607, %v597
        %v621 = vsel %vm612, %v609, %v599
        %v622 = vsel %vm612, %v611, %v601
        %v623 = vsel %vm480, 1, 0
        %v624 = vsel %vm481, 1, 0
        %vm625 = vcmp.eq.s32.totalorder %v623, 1
        %vm626 = vcmp.eq.s32.totalorder %v624, 1
        %v627 = vsel %vm625, %v618, 0.0
        %v628 = vsel %vm626, %v613, 0.0
        %v629 = vsel %vm625, %v619, 0.0
        %v630 = vsel %vm626, %v614, 0.0
        %v631 = vsel %vm625, %v620, 0.0
        %v632 = vsel %vm626, %v615, 0.0
        %v633 = vsel %vm625, %v621, 0.0
        %v634 = vsel %vm626, %v616, 0.0
        %v635 = vsel %vm625, %v622, 0.0
        %v636 = vsel %vm626, %v617, 0.0
        %637 = vrot.lane.b32.xlu0 %v438, 127
        %v638 = vpop.permute.xlu0 %637
        %639 = vrot.lane.b32.xlu0 %v417, 127
        %v640 = vpop.permute.xlu0 %639
        %641 = vrot.lane.b32.xlu0 %v421, 127
        %v642 = vpop.permute.xlu0 %641
        %643 = vrot.lane.b32.xlu0 %v425, 127
        %v644 = vpop.permute.xlu0 %643
        %645 = vrot.lane.b32.xlu0 %v440, 127
        %v646 = vpop.permute.xlu0 %645
        %647 = vrot.lane.b32.xlu0 %v439, 127
        %v648 = vpop.permute.xlu0 %647
        %649 = vrot.lane.b32.xlu0 %v419, 127
        %v650 = vpop.permute.xlu0 %649
        %651 = vrot.lane.b32.xlu0 %v423, 127
        %v652 = vpop.permute.xlu0 %651
        %653 = vrot.lane.b32.xlu0 %v427, 127
        %v654 = vpop.permute.xlu0 %653
        %655 = vrot.lane.b32.xlu0 %v441, 127
        %v656 = vpop.permute.xlu0 %655
        %vm657 = vcmp.lt.s32.totalorder %v443, 127
        %v658 = vsel %vm657, %v638, %v648
        %v659 = vsel %vm657, %v640, %v650
        %v660 = vsel %vm657, %v642, %v652
        %v661 = vsel %vm657, %v644, %v654
        %v662 = vsel %vm657, %v646, %v656
        %v663 = vsel %vm657, %v648, %v638
        %v664 = vsel %vm657, %v650, %v640
        %v665 = vsel %vm657, %v652, %v642
        %v666 = vsel %vm657, %v654, %v644
        %v667 = vsel %vm657, %v656, %v646
        %v668 = vsel %vm574, 1, 0
        %v669 = vsel %vm575, 1, 0
        %vm670 = vcmp.eq.s32.totalorder %v668, 1
        %vm671 = vcmp.eq.s32.totalorder %v669, 1
        %v672 = vsel %vm670, %v658, 0.0
        %v673 = vsel %vm671, %v663, 0.0
        %v674 = vsel %vm670, %v659, 0.0
        %v675 = vsel %vm671, %v664, 0.0
        %v676 = vsel %vm670, %v660, 0.0
        %v677 = vsel %vm671, %v665, 0.0
        %v678 = vsel %vm670, %v661, 0.0
        %v679 = vsel %vm671, %v666, 0.0
        %v680 = vsel %vm670, %v662, 0.0
        %v681 = vsel %vm671, %v667, 0.0
        %682 = vrot.lane.b32.xlu0 %v438, 113
        %v683 = vpop.permute.xlu0 %682
        %684 = vrot.lane.b32.xlu0 %v417, 113
        %v685 = vpop.permute.xlu0 %684
        %686 = vrot.lane.b32.xlu0 %v421, 113
        %v687 = vpop.permute.xlu0 %686
        %688 = vrot.lane.b32.xlu0 %v425, 113
        %v689 = vpop.permute.xlu0 %688
        %690 = vrot.lane.b32.xlu0 %v440, 113
        %v691 = vpop.permute.xlu0 %690
        %692 = vrot.lane.b32.xlu0 %v439, 113
        %v693 = vpop.permute.xlu0 %692
        %694 = vrot.lane.b32.xlu0 %v419, 113
        %v695 = vpop.permute.xlu0 %694
        %696 = vrot.lane.b32.xlu0 %v423, 113
        %v697 = vpop.permute.xlu0 %696
        %698 = vrot.lane.b32.xlu0 %v427, 113
        %v699 = vpop.permute.xlu0 %698
        %700 = vrot.lane.b32.xlu0 %v441, 113
        %v701 = vpop.permute.xlu0 %700
        %vm702 = vcmp.lt.s32.totalorder %v443, 113
        %v703 = vsel %vm702, %v683, %v693
        %v704 = vsel %vm702, %v685, %v695
        %v705 = vsel %vm702, %v687, %v697
        %v706 = vsel %vm702, %v689, %v699
        %v707 = vsel %vm702, %v691, %v701
        %v708 = vsel %vm702, %v693, %v683
        %v709 = vsel %vm702, %v695, %v685
        %v710 = vsel %vm702, %v697, %v687
        %v711 = vsel %vm702, %v699, %v689
        %v712 = vsel %vm702, %v701, %v691
        %vm713 = vcmp.lt.s32.totalorder %v443, 240
        %vm714 = vcmp.lt.s32.totalorder %v444, 240
        %vm715 = vmand %vm713, %vm480
        %vm716 = vmand %vm714, %vm481
        %v717 = vsel %vm715, 1, 0
        %v718 = vsel %vm716, 1, 0
        %vm719 = vcmp.eq.s32.totalorder %v717, 1
        %vm720 = vcmp.eq.s32.totalorder %v718, 1
        %v721 = vsel %vm719, %v703, 0.0
        %v722 = vsel %vm720, %v708, 0.0
        %v723 = vsel %vm719, %v704, 0.0
        %v724 = vsel %vm720, %v709, 0.0
        %v725 = vsel %vm719, %v705, 0.0
        %v726 = vsel %vm720, %v710, 0.0
        %v727 = vsel %vm719, %v706, 0.0
        %v728 = vsel %vm720, %v711, 0.0
        %v729 = vsel %vm719, %v707, 0.0
        %v730 = vsel %vm720, %v712, 0.0
        %731 = vrot.lane.b32.xlu0 %v438, 112
        %v732 = vpop.permute.xlu0 %731
        %733 = vrot.lane.b32.xlu0 %v417, 112
        %v734 = vpop.permute.xlu0 %733
        %735 = vrot.lane.b32.xlu0 %v421, 112
        %v736 = vpop.permute.xlu0 %735
        %737 = vrot.lane.b32.xlu0 %v425, 112
        %v738 = vpop.permute.xlu0 %737
        %739 = vrot.lane.b32.xlu0 %v440, 112
        %v740 = vpop.permute.xlu0 %739
        %741 = vrot.lane.b32.xlu0 %v439, 112
        %v742 = vpop.permute.xlu0 %741
        %743 = vrot.lane.b32.xlu0 %v419, 112
        %v744 = vpop.permute.xlu0 %743
        %745 = vrot.lane.b32.xlu0 %v423, 112
        %v746 = vpop.permute.xlu0 %745
        %747 = vrot.lane.b32.xlu0 %v427, 112
        %v748 = vpop.permute.xlu0 %747
        %749 = vrot.lane.b32.xlu0 %v441, 112
        %v750 = vpop.permute.xlu0 %749
        %vm751 = vcmp.lt.s32.totalorder %v443, 112
        %v752 = vsel %vm751, %v732, %v742
        %v753 = vsel %vm751, %v734, %v744
        %v754 = vsel %vm751, %v736, %v746
        %v755 = vsel %vm751, %v738, %v748
        %v756 = vsel %vm751, %v740, %v750
        %v757 = vsel %vm751, %v742, %v732
        %v758 = vsel %vm751, %v744, %v734
        %v759 = vsel %vm751, %v746, %v736
        %v760 = vsel %vm751, %v748, %v738
        %v761 = vsel %vm751, %v750, %v740
        %v762 = vsel %vm713, 1, 0
        %v763 = vsel %vm714, 1, 0
        %vm764 = vcmp.eq.s32.totalorder %v762, 1
        %vm765 = vcmp.eq.s32.totalorder %v763, 1
        %v766 = vsel %vm764, %v752, 0.0
        %v767 = vsel %vm765, %v757, 0.0
        %v768 = vsel %vm764, %v753, 0.0
        %v769 = vsel %vm765, %v758, 0.0
        %v770 = vsel %vm764, %v754, 0.0
        %v771 = vsel %vm765, %v759, 0.0
        %v772 = vsel %vm764, %v755, 0.0
        %v773 = vsel %vm765, %v760, 0.0
        %v774 = vsel %vm764, %v756, 0.0
        %v775 = vsel %vm765, %v761, 0.0
        %776 = vrot.lane.b32.xlu0 %v438, 111
        %v777 = vpop.permute.xlu0 %776
        %778 = vrot.lane.b32.xlu0 %v417, 111
        %v779 = vpop.permute.xlu0 %778
        %780 = vrot.lane.b32.xlu0 %v421, 111
        %v781 = vpop.permute.xlu0 %780
        %782 = vrot.lane.b32.xlu0 %v425, 111
        %v783 = vpop.permute.xlu0 %782
        %784 = vrot.lane.b32.xlu0 %v440, 111
        %v785 = vpop.permute.xlu0 %784
        %786 = vrot.lane.b32.xlu0 %v439, 111
        %v787 = vpop.permute.xlu0 %786
        %788 = vrot.lane.b32.xlu0 %v419, 111
        %v789 = vpop.permute.xlu0 %788
        %790 = vrot.lane.b32.xlu0 %v423, 111
        %v791 = vpop.permute.xlu0 %790
        %792 = vrot.lane.b32.xlu0 %v427, 111
        %v793 = vpop.permute.xlu0 %792
        %794 = vrot.lane.b32.xlu0 %v441, 111
        %v795 = vpop.permute.xlu0 %794
        %vm796 = vcmp.lt.s32.totalorder %v443, 111
        %v797 = vsel %vm796, %v777, %v787
        %v798 = vsel %vm796, %v779, %v789
        %v799 = vsel %vm796, %v781, %v791
        %v800 = vsel %vm796, %v783, %v793
        %v801 = vsel %vm796, %v785, %v795
        %v802 = vsel %vm796, %v787, %v777
        %v803 = vsel %vm796, %v789, %v779
        %v804 = vsel %vm796, %v791, %v781
        %v805 = vsel %vm796, %v793, %v783
        %v806 = vsel %vm796, %v795, %v785
        %vm807 = vmand %vm713, %vm574
        %vm808 = vmand %vm714, %vm575
        %v809 = vsel %vm807, 1, 0
        %v810 = vsel %vm808, 1, 0
        %vm811 = vcmp.eq.s32.totalorder %v809, 1
        %vm812 = vcmp.eq.s32.totalorder %v810, 1
        %v813 = vsel %vm811, %v797, 0.0
        %v814 = vsel %vm812, %v802, 0.0
        %v815 = vsel %vm811, %v798, 0.0
        %v816 = vsel %vm812, %v803, 0.0
        %v817 = vsel %vm811, %v799, 0.0
        %v818 = vsel %vm812, %v804, 0.0
        %v819 = vsel %vm811, %v800, 0.0
        %v820 = vsel %vm812, %v805, 0.0
        %v821 = vsel %vm811, %v801, 0.0
        %v822 = vsel %vm812, %v806, 0.0
        %v823 = vld [vmem:[#allocation5] sm:$0xff]
        %v824 = vld [vmem:[#allocation5 + $0x8] sm:$0xff]
        %v825 = vld [vmem:[#allocation5 + $0x10] sm:$0xff]
        %v826 = vld [vmem:[%s2] sm:$0xff]
        %828 = vset.pattern.permute.xlu0 0
        %829 = vperm.xlu0 %828, %v826
        %v830 = vpop.permute.xlu0 %829
        %vm832 = vcmask 850944
        %v834 = vsel %vm832, %v825, 0
        %836 = vmatprep.subr.mxu0 %v489
        %837 = vmatpush1.msra.mxu0 %v488
        %838 = vmatprep.subr.mxu0 %v491
        %839 = vmatpush1.msra.mxu0 %v490
        %840 = vmatprep.subr.mxu0 %v493
        %841 = vmatpush1.msra.mxu0 %v492
        %842 = vmatprep.subr.mxu0 %v495
        %843 = vmatpush1.msra.mxu0 %v494
        %844 = vmatprep.subr.mxu0 %v497
        %845 = vmatpush1.msra.mxu0 %v496
        %846 = vmatprep.subr.mxu0 %v534
        %847 = vmatpush1.msra.mxu0 %v533
        %848 = vmatprep.subr.mxu0 %v536
        %849 = vmatpush1.msra.mxu0 %v535
        %850 = vmatprep.subr.mxu0 %v538
        %851 = vmatpush1.msra.mxu0 %v537
        %852 = vmatprep.subr.mxu0 %v540
        %853 = vmatpush1.msra.mxu0 %v539
        %854 = vmatprep.subr.mxu0 %v542
        %855 = vmatpush1.msra.mxu0 %v541
        %856 = vmatprep.subr.mxu0 %v583
        %857 = vmatpush1.msra.mxu0 %v582
        %858 = vmatprep.subr.mxu0 %v585
        %859 = vmatpush1.msra.mxu0 %v584
        %860 = vmatprep.subr.mxu0 %v587
        %861 = vmatpush1.msra.mxu0 %v586
        %862 = vmatprep.subr.mxu0 %v589
        %863 = vmatpush1.msra.mxu0 %v588
        %864 = vmatprep.subr.mxu0 %v591
        %865 = vmatpush1.msra.mxu0 %v590
        %866 = vmatprep.subr.mxu0 %v628
        %867 = vmatpush1.msra.mxu0 %v627
        %868 = vmatprep.subr.mxu0 %v630
        %869 = vmatpush1.msra.mxu0 %v629
        %870 = vmatprep.subr.mxu0 %v632
        %871 = vmatpush1.msra.mxu0 %v631
        %872 = vmatprep.subr.mxu0 %v634
        %873 = vmatpush1.msra.mxu0 %v633
        %874 = vmatprep.subr.mxu0 %v636
        %875 = vmatpush1.msra.mxu0 %v635
        %876 = vmatprep.subr.mxu0 %v439
        %877 = vmatpush1.msra.mxu0 %v438
        %878 = vmatprep.subr.mxu0 %v419
        %879 = vmatpush1.msra.mxu0 %v417
        %880 = vmatprep.subr.mxu0 %v423
        %881 = vmatpush1.msra.mxu0 %v421
        %882 = vmatprep.subr.mxu0 %v427
        %883 = vmatpush1.msra.mxu0 %v425
        %884 = vmatprep.subr.mxu0 %v441
        %885 = vmatpush1.msra.mxu0 %v440
        %886 = vmatprep.subr.mxu0 %v673
        %887 = vmatpush1.msra.mxu0 %v672
        %888 = vmatprep.subr.mxu0 %v675
        %889 = vmatpush1.msra.mxu0 %v674
        %890 = vmatprep.subr.mxu0 %v677
        %891 = vmatpush1.msra.mxu0 %v676
        %892 = vmatprep.subr.mxu0 %v679
        %893 = vmatpush1.msra.mxu0 %v678
        %894 = vmatprep.subr.mxu0 %v681
        %895 = vmatpush1.msra.mxu0 %v680
        %896 = vmatprep.subr.mxu0 %v722
        %897 = vmatpush1.msra.mxu0 %v721
        %898 = vmatprep.subr.mxu0 %v724
        %899 = vmatpush1.msra.mxu0 %v723
        %900 = vmatprep.mubr.f32.mxu0 %v824
        %901 = vmatmul.mubr.f32.gmra.mrb[0].mxu0 %v823
        %v902 = vpop.f32.mrb[0].mxu0
        %v903 = vadd.f32 %v830, %v902
        %v904 = vpop.f32.mrb[0].mxu0
        %v905 = vadd.f32 %v830, %v904
        %906 = vdwg.mxu0
        %907 = vmatprep.subr.mxu0 %v726
        %908 = vmatpush1.msra.mxu0 %v725
        %909 = vmatprep.subr.mxu0 %v728
        %910 = vmatpush1.msra.mxu0 %v727
        %911 = vmatprep.subr.mxu0 %v730
        %912 = vmatpush1.msra.mxu0 %v729
        %913 = vmatprep.subr.mxu0 %v767
        %914 = vmatpush1.msra.mxu0 %v766
        %915 = vmatprep.subr.mxu0 %v769
        %916 = vmatpush1.msra.mxu0 %v768
        %917 = vmatprep.subr.mxu0 %v771
        %918 = vmatpush1.msra.mxu0 %v770
        %919 = vmatprep.subr.mxu0 %v773
        %920 = vmatpush1.msra.mxu0 %v772
        %921 = vmatprep.subr.mxu0 %v775
        %922 = vmatpush1.msra.mxu0 %v774
        %923 = vmatprep.subr.mxu0 %v814
        %924 = vmatpush1.msra.mxu0 %v813
        %925 = vmatprep.subr.mxu0 %v816
        %926 = vmatpush1.msra.mxu0 %v815
        %927 = vmatprep.subr.mxu0 %v818
        %928 = vmatpush1.msra.mxu0 %v817
        %929 = vmatprep.subr.mxu0 %v820
        %930 = vmatpush1.msra.mxu0 %v819
        %931 = vmatprep.subr.mxu0 %v822
        %932 = vmatpush1.msra.mxu0 %v821
        %933 = vmatprep.subr.mxu0 0.0
        %934 = vmatpush1.msra.mxu0 0.0
        %935 = vmatprep.subr.mxu0 0.0
        %936 = vmatpush1.msra.mxu0 0.0
        %937 = vmatprep.subr.mxu0 0.0
        %938 = vmatpush1.msra.mxu0 0.0
        %939 = vmatprep.subr.mxu0 0.0
        %940 = vmatpush1.msra.mxu0 0.0
        %941 = vmatprep.subr.mxu0 0.0
        %942 = vmatpush1.msra.mxu0 0.0
        %943 = vmatprep.subr.mxu0 0.0
        %944 = vmatpush1.msra.mxu0 0.0
        %945 = vmatprep.subr.mxu0 0.0
        %946 = vmatpush1.msra.mxu0 0.0
        %947 = vmatprep.subr.mxu0 0.0
        %948 = vmatpush1.msra.mxu0 0.0
        %949 = vmatprep.subr.mxu0 0.0
        %950 = vmatpush1.msra.mxu0 0.0
        %951 = vmatprep.subr.mxu0 0.0
        %952 = vmatpush1.msra.mxu0 0.0
        %953 = vmatprep.subr.mxu0 0.0
        %954 = vmatpush1.msra.mxu0 0.0
        %955 = vmatprep.subr.mxu0 0.0
        %956 = vmatpush1.msra.mxu0 0.0
        %957 = vmatprep.subr.mxu0 0.0
        %958 = vmatpush1.msra.mxu0 0.0
        %959 = vmatprep.subr.mxu0 0.0
        %960 = vmatpush1.msra.mxu0 0.0
        %961 = vmatprep.subr.mxu0 0.0
        %962 = vmatpush1.msra.mxu0 0.0
        %963 = vmatprep.subr.mxu0 0.0
        %964 = vmatpush1.msra.mxu0 0.0
        %965 = vmatprep.subr.mxu0 0.0
        %966 = vmatpush1.msra.mxu0 0.0
        %967 = vmatprep.subr.mxu0 0.0
        %968 = vmatpush1.msra.mxu0 0.0
        %969 = vmatprep.subr.mxu0 0.0
        %970 = vmatpush1.msra.mxu0 0.0
        %971 = vmatprep.mubr.f32.mxu0 0.0
        %972 = vmatmul.mubr.f32.gmra.mrb[0].mxu0 %v834
        %v973 = vpop.f32.mrb[0].mxu0
        %v974 = vadd.f32 %v903, %v973
        %v975 = vpop.f32.mrb[0].mxu0
        %v976 = vadd.f32 %v905, %v975
        %977 = vdwg.mxu0
        %978 = vst [vmem:[%s254] sm:$0xff] %v974
        %979 = vst [vmem:[%s254 + $0x8] sm:$0xff] %v976
        %v980 = vadd.f32 %v974, %v976
        %981 = vadd.xlane.f32.xlu0 %v980
        %v982 = vpop.xlane.xlu0 %981
        %vm983 = vcmask 7168
        %984 = vst.msk [vmem:[%s270] sm:$0xff] %vm983, %v982
        %v985 = vmul.f32 %v974, %v974
        %v986 = vmul.f32 %v976, %v976
        %v987 = vadd.f32 %v985, %v986
        %988 = vadd.xlane.f32.xlu0 %v987
        %v989 = vpop.xlane.xlu0 %988
        %990 = vst.msk [vmem:[%s274] sm:$0xff] %vm983, %v989
        %s991 = sand.u32 %s100, 1
        %s992 = scalar_lea.sflag [#allocation4], %s991
        %s993 = sand.u32 %s100, 1
        %s994 = smul.addr %s993, 16
        %s995 = scalar_lea.vmem [#allocation7], %s994
        %p996 = scmp.lt.s32.totalorder %s24, 1
        %s997 = scalar_select %p996, %s24, 1
        %s998 = smul.addr %s997, 8
        %s999 = scalar_lea.vmem %s4, %s998
        %p1000 = scmp.lt.s32.totalorder %s24, 1
        %s1001 = scalar_select %p1000, %s24, 1
        %s1002 = smul.addr %s1001, 8
        %s1003 = scalar_lea.vmem %s5, %s1002
        // Predicated region
        $region41: #{tpu_custom_call.1} parent=31 // pred_check
          %p1004 = pneg %p110
        $region42: #{tpu_custom_call.1} parent=31 // pred_check_branch
          %1006 = sbr.rel (%p1004) target = $region44
        $region43: #{tpu_custom_call.1} parent=31 // pred_region
          %s1008 = ssub.s32 256, 256
          %1009 = vsyncadd %s992, %s1008
          %s1010 = smul.addr %s24, 2
          %s1011 = smul.addr %s1010, 128
          %s1012 = scalar_lea.hbm %s3, %s1011
          %s1014 = sshll.u32 %s995, 4
          %s1015 = int_to_ptr.vmem [resolvable:$true] %s1014
          %1017 = dma.vmem_to_hbm [thread:$0]  %s1015, 256, %s1012, %s992
        $region44: #{tpu_custom_call.1} parent=31 // pred_fallthru
          _
        // Predicated region
        $region45: #{tpu_custom_call.1} parent=31 // pred_check
          %p1018 = pneg %p136
        $region46: #{tpu_custom_call.1} parent=31 // pred_check_branch
          %1020 = sbr.rel (%p1018) target = $region48
        $region47: #{tpu_custom_call.1} parent=31 // pred_region
          _
        $region48: #{tpu_custom_call.1} parent=31 // pred_fallthru
          _
        // Predicated region
        $region49: #{tpu_custom_call.1} parent=31 // pred_check
          %p1021 = pneg %p162
        $region50: #{tpu_custom_call.1} parent=31 // pred_check_branch
          %1023 = sbr.rel (%p1021) target = $region52
        $region51: #{tpu_custom_call.1} parent=31 // pred_region
          _
        $region52: #{tpu_custom_call.1} parent=31 // pred_fallthru
          _
      $region32: #{tpu_custom_call.1} parent=5 // pred_fallthru
        _
      %p1024 = scmp.le.s32.totalorder 2, %s19
      // Predicated region
      $region53: #{tpu_custom_call.1} parent=5 // pred_check
        %p1025 = pneg %p1024
      $region54: #{tpu_custom_call.1} parent=5 // pred_check_branch
        %1027 = sbr.rel (%p1025) target = $region56
      $region55: #{tpu_custom_call.1} parent=5 // pred_region
        %s1028 = ssub.s32 %s19, 2
        // Predicated region
        $region57: #{tpu_custom_call.1} parent=55 // pred_check
          %p1029 = pneg %p116
        $region58: #{tpu_custom_call.1} parent=55 // pred_check_branch
          %1031 = sbr.rel (%p1029) target = $region60
        $region59: #{tpu_custom_call.1} parent=55 // pred_region
          %s1032 = sand.u32 %s101, 1
          %s1033 = scalar_lea.sflag [#allocation4], %s1032
          %s1034 = sand.u32 %s101, 1
          %s1035 = smul.addr %s1034, 16
          %s1036 = scalar_lea.vmem [#allocation7], %s1035
          %1037 = dma.done %s1033, 256
        $region60: #{tpu_custom_call.1} parent=55 // pred_fallthru
          _
        // Predicated region
        $region61: #{tpu_custom_call.1} parent=55 // pred_check
          %p1038 = pneg %p142
        $region62: #{tpu_custom_call.1} parent=55 // pred_check_branch
          %1040 = sbr.rel (%p1038) target = $region64
        $region63: #{tpu_custom_call.1} parent=55 // pred_region
          %p1041 = scmp.lt.s32.totalorder %s25, 1
          %s1042 = scalar_select %p1041, %s25, 1
          %s1043 = smul.addr %s1042, 8
          %s1044 = scalar_lea.vmem %s4, %s1043
        $region64: #{tpu_custom_call.1} parent=55 // pred_fallthru
          _
        // Predicated region
        $region65: #{tpu_custom_call.1} parent=55 // pred_check
          %p1045 = pneg %p168
        $region66: #{tpu_custom_call.1} parent=55 // pred_check_branch
          %1047 = sbr.rel (%p1045) target = $region68
        $region67: #{tpu_custom_call.1} parent=55 // pred_region
          %p1048 = scmp.lt.s32.totalorder %s25, 1
          %s1049 = scalar_select %p1048, %s25, 1
          %s1050 = smul.addr %s1049, 8
          %s1051 = scalar_lea.vmem %s5, %s1050
        $region68: #{tpu_custom_call.1} parent=55 // pred_fallthru
          _
      $region56: #{tpu_custom_call.1} parent=5 // pred_fallthru
        _
    $region6: #{tpu_custom_call.1} parent=1 // loop_footer
      %s23 = sadd.s32 1, %s19
    $region7: #{tpu_custom_call.1} parent=1 // loop_footer_branch
      %18 = sbr.rel target = $region3
    $region8: #{tpu_custom_call.1} parent=1 // loop_exit
      _
    %1052 = vsyncpa [#allocation3], 1
    %s1053 = scalar_lea.sflag [#allocation3], 1
    %1054 = vsyncpa %s1053, 1
    %1055 = vsyncpa [#allocation6], 1
    %1056 = vsyncpa [#allocation4], 1
    %s1057 = scalar_lea.sflag [#allocation4], 1
    %1058 = vsyncpa %s1057, 1

</llo_original>
